<compile_context>
chip_gen: v7x
topology: tpu7x:2x2x1
jax: 0.10.0
libtpu: 0.0.40
codegen_flags: <defaults>
</compile_context>

<pallas_src>
import math

import jax
import jax.numpy as jnp
from jax import lax
from jax.experimental import pallas as pl
from jax.experimental.pallas import tpu as pltpu

_VMEM_LIMIT = 48 * 1024 * 1024  # above the 16/32 MiB scoped defaults, under v7x's 64 MiB physical


def _round_up(x, m):
    return ((x + m - 1) // m) * m


def _pick_row_tile(total_rows, max_rows):
    """Largest divisor of total_rows that is a multiple of 8 and <= max_rows (or full extent)."""
    if total_rows <= max_rows:
        return total_rows
    for d in range(max_rows - (max_rows % 8), 7, -8):
        if total_rows % d == 0:
            return d
    return total_rows  # fall back to a single full-height block


def _relu_matmul_stats_kernel(p_ref, w_ref, y_ref, stat_ref):
    """ReLU + conv-as-matmul (bf16 in, f32 accumulation) + per-tile BN partial sums."""
    x = jnp.maximum(p_ref[...], 0)                                   # ReLU (VPU)
    y = jnp.dot(x, w_ref[...], preferred_element_type=jnp.float32)   # MXU, f32 accumulate
    y_ref[...] = y.astype(y_ref.dtype)                               # bf16 writeback (halves HBM)
    # Per-tile partial statistics in f32, each tile writes its own slot (no cross-tile
    # accumulator -> grid axis can be "parallel"); rows written separately (no concat).
    stat_ref[:, 0:1, :] = jnp.sum(y, axis=0, keepdims=True)[None]
    stat_ref[:, 1:2, :] = jnp.sum(y * y, axis=0, keepdims=True)[None]


def _bn_apply_kernel(y_ref, scale_ref, shift_ref, o_ref):
    """Elementwise y*scale + shift on a lane-dense folded view (mem-bound)."""
    o_ref[...] = y_ref[...].astype(jnp.float32) * scale_ref[...] + shift_ref[...]


def relu_conv_bn(x_nchw, weight, gamma, beta, *, stride, padding, eps=1e-5,
                 out_layout="NCHW"):
    """Forward of PyTorch ReLUConvBN. x_nchw: (N, C_in, H, W), weight: (C_out, C_in, KH, KW)."""
    N, C_in, H, W = x_nchw.shape
    C_out, _, KH, KW = weight.shape

    # --- glue: NCHW -> NHWC, spatial zero-pad (ReLU(0)=0 so pad-then-ReLU == ReLU-then-pad) ---
    x = jnp.transpose(x_nchw, (0, 2, 3, 1))
    if padding:
        x = jnp.pad(x, ((0, 0), (padding, padding), (padding, padding), (0, 0)))
    Hp, Wp = H + 2 * padding, W + 2 * padding
    Ho = (Hp - KH) // stride + 1
    Wo = (Wp - KW) // stride + 1

    if KH == 1 and KW == 1:
        # 1x1 conv: no im2col duplication, just a strided view + reshape.
        patches = x[:, ::stride, ::stride, :][:, :Ho, :Wo, :].reshape(N * Ho * Wo, C_in)
    else:
        # TODO(synk): for KH*KW > 1 gather the KH*KW shifted slices inside the kernel (or
        # accumulate KH*KW shifted matmuls) instead of materializing a KH*KW-times
        # duplicated patch matrix in HBM.
        cols = []
        for ih in range(KH):
            for iw in range(KW):
                cols.append(x[:, ih:ih + stride * Ho:stride, iw:iw + stride * Wo:stride, :])
        patches = jnp.stack(cols, axis=3).reshape(N * Ho * Wo, KH * KW * C_in)
    patches = patches.astype(jnp.bfloat16)   # bf16 MXU path, half the patch DMA bytes

    M = N * Ho * Wo
    K = KH * KW * C_in

    # --- M tiling: large tiles (per-grid-step overhead ~0.35us). Padded rows are zeros and
    #     contribute nothing to the conv output or BN sums (we divide by the true M). ---
    if M > 1024:
        Mp = _round_up(M, 1024)     # keeps all derived row counts multiples of 8
        tm1 = 512                   # multiple of 256 -> MXU M dimension fully fed on v6e/v7x
        while tm1 > 128 and (2 * tm1 * K * 2 + 2 * K * C_out * 2 + 2 * tm1 * C_out * 2) > (32 << 20):
            tm1 //= 2               # keep double-buffered tiles within the VMEM budget
        # TODO(synk): for very large K (e.g. 3x3 with C_in >= 512) add a K grid axis with a
        # VMEM f32 accumulator (pl.when init/finalize) instead of one full-K block.
    else:
        Mp = _round_up(M, 128)
        tm1 = Mp                    # single tile for small problems
    patches = jnp.pad(patches, ((0, Mp - M), (0, 0)))

    # PyTorch weight (C_out, C_in, KH, KW) -> (KH*KW*C_in, C_out), matching patch ordering.
    w_mat = jnp.transpose(weight, (0, 2, 3, 1)).reshape(C_out, K).T.astype(jnp.bfloat16)

    gm = Mp // tm1

    # --- kernel 1: ReLU + conv matmul + per-tile partial BN sums ---
    y, stats = pl.pallas_call(
        _relu_matmul_stats_kernel,
        out_shape=(jax.ShapeDtypeStruct((Mp, C_out), jnp.bfloat16),
                   jax.ShapeDtypeStruct((gm, 2, C_out), jnp.float32)),
        grid_spec=pltpu.PrefetchScalarGridSpec(
            num_scalar_prefetch=0, grid=(gm,),
            in_specs=[pl.BlockSpec((tm1, K), lambda i: (i, 0)),
                      pl.BlockSpec((K, C_out), lambda i: (0, 0))],
            out_specs=(pl.BlockSpec((tm1, C_out), lambda i: (i, 0)),
                       pl.BlockSpec((1, 2, C_out), lambda i: (i, 0, 0)))),
        compiler_params=pltpu.CompilerParams(
            dimension_semantics=("parallel",),
            vmem_limit_bytes=_VMEM_LIMIT),
    )(patches, w_mat)

    # --- tiny glue: reduce partial stats, build BN scale/shift in f32 ---
    s = jnp.sum(stats[:, 0, :], axis=0)
    ss = jnp.sum(stats[:, 1, :], axis=0)
    inv_m = 1.0 / float(M)
    mean = s * inv_m
    var = jnp.maximum(ss * inv_m - mean * mean, 0.0)   # clamp guards E[y^2]-E[y]^2 cancellation
    scale = gamma.astype(jnp.float32) * lax.rsqrt(var + eps)
    shift = beta.astype(jnp.float32) - mean * scale
    # TODO(synk): running_mean / running_var momentum buffers are not updated (forward output only).

    # --- kernel 2: lane-dense BN apply. Fold spatial rows into the lane dim so the last dim is
    #     a multiple of 128 even for small C_out (unmasked vst, full VPU lane utilization). ---
    Lw = (C_out * 128) // math.gcd(C_out, 128)   # lcm(C_out, 128)
    reps = Lw // C_out
    Rf = (Mp * C_out) // Lw
    y_f = y.reshape(Rf, Lw)                      # row-major regroup: free layout change
    scale_row = jnp.tile(scale, reps).reshape(1, Lw)
    shift_row = jnp.tile(shift, reps).reshape(1, Lw)

    max_rows = max(8, ((4 << 20) // (Lw * 4)) // 8 * 8)   # ~4 MiB f32 per output block
    tb2 = _pick_row_tile(Rf, max_rows)

    out_f = pl.pallas_call(
        _bn_apply_kernel,
        out_shape=jax.ShapeDtypeStruct((Rf, Lw), jnp.float32),
        grid_spec=pltpu.PrefetchScalarGridSpec(
            num_scalar_prefetch=0, grid=(Rf // tb2,),
            in_specs=[pl.BlockSpec((tb2, Lw), lambda i: (i, 0)),
                      pl.BlockSpec((1, Lw), lambda i: (0, 0)),
                      pl.BlockSpec((1, Lw), lambda i: (0, 0))],
            out_specs=pl.BlockSpec((tb2, Lw), lambda i: (i, 0))),
        compiler_params=pltpu.CompilerParams(
            dimension_semantics=("parallel",),
            vmem_limit_bytes=_VMEM_LIMIT),
    )(y_f, scale_row, shift_row)

    out = out_f.reshape(Mp, C_out)[:M].reshape(N, Ho, Wo, C_out)
    if out_layout == "NHWC":
        return out
    # TODO(synk): if the consumer accepts NHWC, return it directly and skip this extra HBM pass.
    return jnp.transpose(out, (0, 3, 1, 2))


def _reference(x, w, gamma, beta, stride, padding, eps=1e-5):
    """Pure-JAX f32 reference of ReLU -> Conv2d(no bias) -> BatchNorm2d(training batch stats)."""
    xr = jnp.maximum(x, 0.0)
    y = lax.conv_general_dilated(xr, w, window_strides=(stride, stride),
                                 padding=[(padding, padding), (padding, padding)],
                                 dimension_numbers=("NCHW", "OIHW", "NCHW"))
    mean = jnp.mean(y, axis=(0, 2, 3), keepdims=True)
    var = jnp.mean((y - mean) ** 2, axis=(0, 2, 3), keepdims=True)
    return (y - mean) / jnp.sqrt(var + eps) * gamma.reshape(1, -1, 1, 1) + beta.reshape(1, -1, 1, 1)


if __name__ == "__main__":
    # ReLUConvBN(C_in=4, C_out=8, kernel_size=1, stride=1, padding=0) at small shapes.
    N, C_in, C_out, H, W = 2, 4, 8, 16, 16
    kernel_size, stride, padding = 1, 1, 0

    key = jax.random.PRNGKey(0)
    kx, kw = jax.random.split(key)
    x = jax.random.normal(kx, (N, C_in, H, W), dtype=jnp.float32)
    weight = jax.random.normal(kw, (C_out, C_in, kernel_size, kernel_size), dtype=jnp.float32) * 0.1
    gamma = jnp.ones((C_out,), dtype=jnp.float32)   # affine=True init (weight=1, bias=0)
    beta = jnp.zeros((C_out,), dtype=jnp.float32)

    out = relu_conv_bn(x, weight, gamma, beta, stride=stride, padding=padding)
    out = jax.block_until_ready(out)

    ref = _reference(x, weight, gamma, beta, stride, padding)
    assert out.shape == ref.shape, (out.shape, ref.shape)
    # bf16 MXU inputs + bf16 intermediate y: tolerance sized for bf16 (~2^-8 relative); outputs
    # are O(1) because BN normalizes to unit variance, so real bugs would be errors of order 1.
    max_err = float(jnp.max(jnp.abs(out - ref)))
    assert jnp.allclose(out, ref, atol=5e-2, rtol=5e-2), max_err

    print("KERNEL_OK")
</pallas_src>

<mosaic_0001>
module attributes {stable_mosaic.version = 11 : i64} {
  func.func @_relu_matmul_stats_kernel(%arg0: i32, %arg1: memref<512x4xbf16, #tpu.memory_space<vmem>>, %arg2: memref<4x8xbf16, #tpu.memory_space<vmem>>, %arg3: memref<512x8xbf16, #tpu.memory_space<vmem>>, %arg4: memref<1x2x8xf32, #tpu.memory_space<vmem>>) attributes {dimension_semantics = [#tpu.dimension_semantics<parallel>], iteration_bounds = array<i64: 1>, scalar_prefetch = 0 : i64, scratch_operands = 0 : i64, tpu.core_type = #tpu.core_type<tc>, window_params = [{transform_indices = @transform_0, window_bounds = array<i64: 512, 4>}, {pipeline_mode = #tpu.pipeline_mode<synchronous>, transform_indices = @transform_1, window_bounds = array<i64: 4, 8>}, {transform_indices = @transform_2, window_bounds = array<i64: 512, 8>}, {transform_indices = @transform_3, window_bounds = array<i64: 1, 2, 8>}]} {
    %c0 = arith.constant 0 : index
    %c0_0 = arith.constant 0 : index
    %0 = vector.load %arg1[%c0, %c0_0] : memref<512x4xbf16, #tpu.memory_space<vmem>>, vector<512x4xbf16>
    %cst = arith.constant 0.000000e+00 : bf16
    %1 = vector.broadcast %cst : bf16 to vector<512x4xbf16>
    %2 = arith.maximumf %0, %1 : vector<512x4xbf16>
    %c0_1 = arith.constant 0 : index
    %c0_2 = arith.constant 0 : index
    %3 = vector.load %arg2[%c0_1, %c0_2] : memref<4x8xbf16, #tpu.memory_space<vmem>>, vector<4x8xbf16>
    %cst_3 = arith.constant dense<0.000000e+00> : vector<512x8xf32>
    %4 = tpu.matmul %2, %3, %cst_3 {dimension_numbers = #tpu.dot_dimension_numbers<[1], [0], [0], [1], [0, 0, 1, 1], [], []>} : vector<512x4xbf16>, vector<4x8xbf16>, vector<512x8xf32> -> vector<512x8xf32>
    %5 = arith.truncf %4 : vector<512x8xf32> to vector<512x8xbf16>
    %c0_4 = arith.constant 0 : index
    %c0_5 = arith.constant 0 : index
    %6 = vector.load %arg3[%c0_4, %c0_5] : memref<512x8xbf16, #tpu.memory_space<vmem>>, vector<512x8xbf16>
    tpu.vector_store %arg3[%c0_4, %c0_5], %5 {strides = array<i32>} : memref<512x8xbf16, #tpu.memory_space<vmem>>, vector<512x8xbf16>,
    %cst_6 = arith.constant dense<0.000000e+00> : vector<8xf32>
    %7 = vector.multi_reduction <add>, %4, %cst_6 [0] : vector<512x8xf32> to vector<8xf32>
    %8 = vector.shape_cast %7 : vector<8xf32> to vector<1x8xf32>
    %9 = vector.shape_cast %8 : vector<1x8xf32> to vector<1x1x8xf32>
    %c0_7 = arith.constant 0 : index
    %c0_8 = arith.constant 0 : index
    %c0_9 = arith.constant 0 : index
    %10 = vector.load %arg4[%c0_7, %c0_8, %c0_9] : memref<1x2x8xf32, #tpu.memory_space<vmem>>, vector<1x1x8xf32>
    tpu.vector_store %arg4[%c0_7, %c0_8, %c0_9], %9 {strides = array<i32>} : memref<1x2x8xf32, #tpu.memory_space<vmem>>, vector<1x1x8xf32>,
    %11 = arith.mulf %4, %4 : vector<512x8xf32>
    %cst_10 = arith.constant dense<0.000000e+00> : vector<8xf32>
    %12 = vector.multi_reduction <add>, %11, %cst_10 [0] : vector<512x8xf32> to vector<8xf32>
    %13 = vector.shape_cast %12 : vector<8xf32> to vector<1x8xf32>
    %14 = vector.shape_cast %13 : vector<1x8xf32> to vector<1x1x8xf32>
    %c0_11 = arith.constant 0 : index
    %c1 = arith.constant 1 : index
    %c0_12 = arith.constant 0 : index
    %15 = vector.load %arg4[%c0_11, %c1, %c0_12] : memref<1x2x8xf32, #tpu.memory_space<vmem>>, vector<1x1x8xf32>
    tpu.vector_store %arg4[%c0_11, %c1, %c0_12], %14 {strides = array<i32>} : memref<1x2x8xf32, #tpu.memory_space<vmem>>, vector<1x1x8xf32>,
    return
  }
  func.func @transform_0(%arg0: i32) -> (i32, i32) {
    %c0_i32 = arith.constant 0 : i32
    %c0_i32_0 = arith.constant 0 : i32
    return %arg0, %c0_i32 : i32, i32
  }
  func.func @transform_1(%arg0: i32) -> (i32, i32) {
    %c0_i32 = arith.constant 0 : i32
    %c0_i32_0 = arith.constant 0 : i32
    %c0_i32_1 = arith.constant 0 : i32
    return %c0_i32, %c0_i32_0 : i32, i32
  }
  func.func @transform_2(%arg0: i32) -> (i32, i32) {
    %c0_i32 = arith.constant 0 : i32
    %c0_i32_0 = arith.constant 0 : i32
    return %arg0, %c0_i32 : i32, i32
  }
  func.func @transform_3(%arg0: i32) -> (i32, i32, i32) {
    %c0_i32 = arith.constant 0 : i32
    %c0_i32_0 = arith.constant 0 : i32
    %c0_i32_1 = arith.constant 0 : i32
    return %arg0, %c0_i32, %c0_i32_0 : i32, i32, i32
  }
}

</mosaic_0001>

<llo_original>
// kernel: tpu_custom_call.1
$region0: #{tpu_custom_call.1}
  #allocation0 [shape = 'u32[]', space=smem, size = 0x4, offset = 0x4, fixed_abs, tag = 'smem constant byte address 0x4 - core index']
  #allocation1 [shape = 'u32[144,128]{1,0:T(1,128)}', space=vmem, size = 0x12000, scoped, tag = 'internal scratch']
  %s0 = inlined_call_operand.vmem [shape: bf16[512,4], index: 0, kind: input, shape index: {}]
  %s1 = inlined_call_operand.vmem [shape: bf16[4,8], index: 1, kind: input, shape index: {}]
  %s2 = inlined_call_operand.vmem [shape: bf16[512,8], index: 2, kind: output, shape index: {0}]
  %s3 = inlined_call_operand.hbm [shape: f32[1,2,8], index: 3, kind: output, shape index: {1}]
  %4 = xla_tuple %s2, %s3
  %s5 = sld [smem:[#allocation0]]
  $region26: #{tpu_custom_call.1} parent=0
    _
  %s7 = ssub.s32 1, %s5
  %s8 = scalar_select 0, %s7, %s5
  $region1: #{tpu_custom_call.1} parent=0
    #allocation2 [shape = 'u8[1024]{0}', space=vmem, size = 0x400, scoped, tag = 'output window, operand 1, single buffered']
    #allocation3 [shape = 's32[1]{0}', space=sflag, size = 0x4, scoped, tag = 'scoped memory for tpu_custom_call.1']
    %9 = vsyncpa [#allocation3], 0
    // Predicated region
    $region2: #{tpu_custom_call.1} parent=1 // pred_check
      _
    $region3: #{tpu_custom_call.1} parent=1 // pred_check_branch
      %11 = sbr.rel (0) target = $region5
    $region4: #{tpu_custom_call.1} parent=1 // pred_region
      _
    $region5: #{tpu_custom_call.1} parent=1 // pred_fallthru
      _
    // Predicated region
    $region6: #{tpu_custom_call.1} parent=1 // pred_check
      _
    $region7: #{tpu_custom_call.1} parent=1 // pred_check_branch
      %13 = sbr.rel (0) target = $region9
    $region8: #{tpu_custom_call.1} parent=1 // pred_region
      _
    $region9: #{tpu_custom_call.1} parent=1 // pred_fallthru
      _
    %v15 = vld [vmem:[%s0] sm:$0xf]
    %v16 = vld [vmem:[%s0 + $0x4] sm:$0xf]
    %v17 = vld [vmem:[%s0 + $0x8] sm:$0xf]
    %v18 = vld [vmem:[%s0 + $0xc] sm:$0xf]
    %v19 = vld [vmem:[%s0 + $0x10] sm:$0xf]
    %v20 = vld [vmem:[%s0 + $0x14] sm:$0xf]
    %v21 = vld [vmem:[%s0 + $0x18] sm:$0xf]
    %v22 = vld [vmem:[%s0 + $0x1c] sm:$0xf]
    %v23 = vld [vmem:[%s0 + $0x20] sm:$0xf]
    %v24 = vld [vmem:[%s0 + $0x24] sm:$0xf]
    %v25 = vld [vmem:[%s0 + $0x28] sm:$0xf]
    %v26 = vld [vmem:[%s0 + $0x2c] sm:$0xf]
    %v27 = vld [vmem:[%s0 + $0x30] sm:$0xf]
    %v28 = vld [vmem:[%s0 + $0x34] sm:$0xf]
    %v29 = vld [vmem:[%s0 + $0x38] sm:$0xf]
    %v30 = vld [vmem:[%s0 + $0x3c] sm:$0xf]
    %v31 = vld [vmem:[%s0 + $0x40] sm:$0xf]
    %v32 = vld [vmem:[%s0 + $0x44] sm:$0xf]
    %v33 = vld [vmem:[%s0 + $0x48] sm:$0xf]
    %v34 = vld [vmem:[%s0 + $0x4c] sm:$0xf]
    %v35 = vld [vmem:[%s0 + $0x50] sm:$0xf]
    %v36 = vld [vmem:[%s0 + $0x54] sm:$0xf]
    %v37 = vld [vmem:[%s0 + $0x58] sm:$0xf]
    %v38 = vld [vmem:[%s0 + $0x5c] sm:$0xf]
    %v39 = vld [vmem:[%s0 + $0x60] sm:$0xf]
    %v40 = vld [vmem:[%s0 + $0x64] sm:$0xf]
    %v41 = vld [vmem:[%s0 + $0x68] sm:$0xf]
    %v42 = vld [vmem:[%s0 + $0x6c] sm:$0xf]
    %v43 = vld [vmem:[%s0 + $0x70] sm:$0xf]
    %v44 = vld [vmem:[%s0 + $0x74] sm:$0xf]
    %v45 = vld [vmem:[%s0 + $0x78] sm:$0xf]
    %v46 = vld [vmem:[%s0 + $0x7c] sm:$0xf]
    %v47 = vld [vmem:[%s0 + $0x80] sm:$0xf]
    %v48 = vld [vmem:[%s0 + $0x84] sm:$0xf]
    %v49 = vld [vmem:[%s0 + $0x88] sm:$0xf]
    %v50 = vld [vmem:[%s0 + $0x8c] sm:$0xf]
    %v51 = vld [vmem:[%s0 + $0x90] sm:$0xf]
    %v52 = vld [vmem:[%s0 + $0x94] sm:$0xf]
    %v53 = vld [vmem:[%s0 + $0x98] sm:$0xf]
    %v54 = vld [vmem:[%s0 + $0x9c] sm:$0xf]
    %v55 = vld [vmem:[%s0 + $0xa0] sm:$0xf]
    %v56 = vld [vmem:[%s0 + $0xa4] sm:$0xf]
    %v57 = vld [vmem:[%s0 + $0xa8] sm:$0xf]
    %v58 = vld [vmem:[%s0 + $0xac] sm:$0xf]
    %v59 = vld [vmem:[%s0 + $0xb0] sm:$0xf]
    %v60 = vld [vmem:[%s0 + $0xb4] sm:$0xf]
    %v61 = vld [vmem:[%s0 + $0xb8] sm:$0xf]
    %v62 = vld [vmem:[%s0 + $0xbc] sm:$0xf]
    %v63 = vld [vmem:[%s0 + $0xc0] sm:$0xf]
    %v64 = vld [vmem:[%s0 + $0xc4] sm:$0xf]
    %v65 = vld [vmem:[%s0 + $0xc8] sm:$0xf]
    %v66 = vld [vmem:[%s0 + $0xcc] sm:$0xf]
    %v67 = vld [vmem:[%s0 + $0xd0] sm:$0xf]
    %v68 = vld [vmem:[%s0 + $0xd4] sm:$0xf]
    %v69 = vld [vmem:[%s0 + $0xd8] sm:$0xf]
    %v70 = vld [vmem:[%s0 + $0xdc] sm:$0xf]
    %v71 = vld [vmem:[%s0 + $0xe0] sm:$0xf]
    %v72 = vld [vmem:[%s0 + $0xe4] sm:$0xf]
    %v73 = vld [vmem:[%s0 + $0xe8] sm:$0xf]
    %v74 = vld [vmem:[%s0 + $0xec] sm:$0xf]
    %v75 = vld [vmem:[%s0 + $0xf0] sm:$0xf]
    %v76 = vld [vmem:[%s0 + $0xf4] sm:$0xf]
    %v77 = vld [vmem:[%s0 + $0xf8] sm:$0xf]
    %v78 = vld [vmem:[%s0 + $0xfc] sm:$0xf]
    %v79 = vmax.bf16 %v15, 0
    %v80 = vmax.bf16 %v16, 0
    %v81 = vmax.bf16 %v17, 0
    %v82 = vmax.bf16 %v18, 0
    %v83 = vmax.bf16 %v19, 0
    %v84 = vmax.bf16 %v20, 0
    %v85 = vmax.bf16 %v21, 0
    %v86 = vmax.bf16 %v22, 0
    %v87 = vmax.bf16 %v23, 0
    %v88 = vmax.bf16 %v24, 0
    %v89 = vmax.bf16 %v25, 0
    %v90 = vmax.bf16 %v26, 0
    %v91 = vmax.bf16 %v27, 0
    %v92 = vmax.bf16 %v28, 0
    %v93 = vmax.bf16 %v29, 0
    %v94 = vmax.bf16 %v30, 0
    %v95 = vmax.bf16 %v31, 0
    %v96 = vmax.bf16 %v32, 0
    %v97 = vmax.bf16 %v33, 0
    %v98 = vmax.bf16 %v34, 0
    %v99 = vmax.bf16 %v35, 0
    %v100 = vmax.bf16 %v36, 0
    %v101 = vmax.bf16 %v37, 0
    %v102 = vmax.bf16 %v38, 0
    %v103 = vmax.bf16 %v39, 0
    %v104 = vmax.bf16 %v40, 0
    %v105 = vmax.bf16 %v41, 0
    %v106 = vmax.bf16 %v42, 0
    %v107 = vmax.bf16 %v43, 0
    %v108 = vmax.bf16 %v44, 0
    %v109 = vmax.bf16 %v45, 0
    %v110 = vmax.bf16 %v46, 0
    %v111 = vmax.bf16 %v47, 0
    %v112 = vmax.bf16 %v48, 0
    %v113 = vmax.bf16 %v49, 0
    %v114 = vmax.bf16 %v50, 0
    %v115 = vmax.bf16 %v51, 0
    %v116 = vmax.bf16 %v52, 0
    %v117 = vmax.bf16 %v53, 0
    %v118 = vmax.bf16 %v54, 0
    %v119 = vmax.bf16 %v55, 0
    %v120 = vmax.bf16 %v56, 0
    %v121 = vmax.bf16 %v57, 0
    %v122 = vmax.bf16 %v58, 0
    %v123 = vmax.bf16 %v59, 0
    %v124 = vmax.bf16 %v60, 0
    %v125 = vmax.bf16 %v61, 0
    %v126 = vmax.bf16 %v62, 0
    %v127 = vmax.bf16 %v63, 0
    %v128 = vmax.bf16 %v64, 0
    %v129 = vmax.bf16 %v65, 0
    %v130 = vmax.bf16 %v66, 0
    %v131 = vmax.bf16 %v67, 0
    %v132 = vmax.bf16 %v68, 0
    %v133 = vmax.bf16 %v69, 0
    %v134 = vmax.bf16 %v70, 0
    %v135 = vmax.bf16 %v71, 0
    %v136 = vmax.bf16 %v72, 0
    %v137 = vmax.bf16 %v73, 0
    %v138 = vmax.bf16 %v74, 0
    %v139 = vmax.bf16 %v75, 0
    %v140 = vmax.bf16 %v76, 0
    %v141 = vmax.bf16 %v77, 0
    %v142 = vmax.bf16 %v78, 0
    %v143 = vld [vmem:[%s1] sm:$0x3]
    %v208 = vunpack.c.l.b16 %v79
    %v209 = vunpack.c.l.b16 %v80
    %v210 = vunpack.c.l.b16 %v81
    %v211 = vunpack.c.l.b16 %v82
    %v212 = vunpack.c.l.b16 %v83
    %v213 = vunpack.c.l.b16 %v84
    %v214 = vunpack.c.l.b16 %v85
    %v215 = vunpack.c.l.b16 %v86
    %v216 = vunpack.c.l.b16 %v87
    %v217 = vunpack.c.l.b16 %v88
    %v218 = vunpack.c.l.b16 %v89
    %v219 = vunpack.c.l.b16 %v90
    %v220 = vunpack.c.l.b16 %v91
    %v221 = vunpack.c.l.b16 %v92
    %v222 = vunpack.c.l.b16 %v93
    %v223 = vunpack.c.l.b16 %v94
    %v224 = vunpack.c.l.b16 %v95
    %v225 = vunpack.c.l.b16 %v96
    %v226 = vunpack.c.l.b16 %v97
    %v227 = vunpack.c.l.b16 %v98
    %v228 = vunpack.c.l.b16 %v99
    %v229 = vunpack.c.l.b16 %v100
    %v230 = vunpack.c.l.b16 %v101
    %v231 = vunpack.c.l.b16 %v102
    %v232 = vunpack.c.l.b16 %v103
    %v233 = vunpack.c.l.b16 %v104
    %v234 = vunpack.c.l.b16 %v105
    %v235 = vunpack.c.l.b16 %v106
    %v236 = vunpack.c.l.b16 %v107
    %v237 = vunpack.c.l.b16 %v108
    %v238 = vunpack.c.l.b16 %v109
    %v239 = vunpack.c.l.b16 %v110
    %v240 = vunpack.c.l.b16 %v111
    %v241 = vunpack.c.l.b16 %v112
    %v242 = vunpack.c.l.b16 %v113
    %v243 = vunpack.c.l.b16 %v114
    %v244 = vunpack.c.l.b16 %v115
    %v245 = vunpack.c.l.b16 %v116
    %v246 = vunpack.c.l.b16 %v117
    %v247 = vunpack.c.l.b16 %v118
    %v248 = vunpack.c.l.b16 %v119
    %v249 = vunpack.c.l.b16 %v120
    %v250 = vunpack.c.l.b16 %v121
    %v251 = vunpack.c.l.b16 %v122
    %v252 = vunpack.c.l.b16 %v123
    %v253 = vunpack.c.l.b16 %v124
    %v254 = vunpack.c.l.b16 %v125
    %v255 = vunpack.c.l.b16 %v126
    %v256 = vunpack.c.l.b16 %v127
    %v257 = vunpack.c.l.b16 %v128
    %v258 = vunpack.c.l.b16 %v129
    %v259 = vunpack.c.l.b16 %v130
    %v260 = vunpack.c.l.b16 %v131
    %v261 = vunpack.c.l.b16 %v132
    %v262 = vunpack.c.l.b16 %v133
    %v263 = vunpack.c.l.b16 %v134
    %v264 = vunpack.c.l.b16 %v135
    %v265 = vunpack.c.l.b16 %v136
    %v266 = vunpack.c.l.b16 %v137
    %v267 = vunpack.c.l.b16 %v138
    %v268 = vunpack.c.l.b16 %v139
    %v269 = vunpack.c.l.b16 %v140
    %v270 = vunpack.c.l.b16 %v141
    %v271 = vunpack.c.l.b16 %v142
    %v272 = vpack.c.b16 %v209, %v208
    %v273 = vpack.c.b16 %v211, %v210
    %v274 = vpack.c.b16 %v213, %v212
    %v275 = vpack.c.b16 %v215, %v214
    %v276 = vpack.c.b16 %v217, %v216
    %v277 = vpack.c.b16 %v219, %v218
    %v278 = vpack.c.b16 %v221, %v220
    %v279 = vpack.c.b16 %v223, %v222
    %v280 = vpack.c.b16 %v225, %v224
    %v281 = vpack.c.b16 %v227, %v226
    %v282 = vpack.c.b16 %v229, %v228
    %v283 = vpack.c.b16 %v231, %v230
    %v284 = vpack.c.b16 %v233, %v232
    %v285 = vpack.c.b16 %v235, %v234
    %v286 = vpack.c.b16 %v237, %v236
    %v287 = vpack.c.b16 %v239, %v238
    %v288 = vpack.c.b16 %v241, %v240
    %v289 = vpack.c.b16 %v243, %v242
    %v290 = vpack.c.b16 %v245, %v244
    %v291 = vpack.c.b16 %v247, %v246
    %v292 = vpack.c.b16 %v249, %v248
    %v293 = vpack.c.b16 %v251, %v250
    %v294 = vpack.c.b16 %v253, %v252
    %v295 = vpack.c.b16 %v255, %v254
    %v296 = vpack.c.b16 %v257, %v256
    %v297 = vpack.c.b16 %v259, %v258
    %v298 = vpack.c.b16 %v261, %v260
    %v299 = vpack.c.b16 %v263, %v262
    %v300 = vpack.c.b16 %v265, %v264
    %v301 = vpack.c.b16 %v267, %v266
    %v302 = vpack.c.b16 %v269, %v268
    %v303 = vpack.c.b16 %v271, %v270
    %vm304 = vcmask 31744
    %v306 = vsel %vm304, %v272, 0
    %v309 = vsel %vm304, %v273, 0
    %v312 = vsel %vm304, %v274, 0
    %v315 = vsel %vm304, %v275, 0
    %v318 = vsel %vm304, %v276, 0
    %v321 = vsel %vm304, %v277, 0
    %v324 = vsel %vm304, %v278, 0
    %v327 = vsel %vm304, %v279, 0
    %v330 = vsel %vm304, %v280, 0
    %v333 = vsel %vm304, %v281, 0
    %v336 = vsel %vm304, %v282, 0
    %v339 = vsel %vm304, %v283, 0
    %v342 = vsel %vm304, %v284, 0
    %v345 = vsel %vm304, %v285, 0
    %v348 = vsel %vm304, %v286, 0
    %v351 = vsel %vm304, %v287, 0
    %v354 = vsel %vm304, %v288, 0
    %v357 = vsel %vm304, %v289, 0
    %v360 = vsel %vm304, %v290, 0
    %v363 = vsel %vm304, %v291, 0
    %v366 = vsel %vm304, %v292, 0
    %v369 = vsel %vm304, %v293, 0
    %v372 = vsel %vm304, %v294, 0
    %v375 = vsel %vm304, %v295, 0
    %v378 = vsel %vm304, %v296, 0
    %v381 = vsel %vm304, %v297, 0
    %v384 = vsel %vm304, %v298, 0
    %v387 = vsel %vm304, %v299, 0
    %v390 = vsel %vm304, %v300, 0
    %v393 = vsel %vm304, %v301, 0
    %v396 = vsel %vm304, %v302, 0
    %v399 = vsel %vm304, %v303, 0
    %vm401 = vcmask 1041408
    %v403 = vsel %vm401, %v143, 0
    %405 = vmatprep.subr.bf16.mxu0 0
    %406 = vmatpush1.bf16.msra.mxu0 %v403
    %407 = vmatprep.subr.bf16.mxu0 0
    %408 = vmatpush1.bf16.msra.mxu0 0
    %409 = vmatprep.subr.bf16.mxu0 0
    %410 = vmatpush1.bf16.msra.mxu0 0
    %411 = vmatprep.subr.bf16.mxu0 0
    %412 = vmatpush1.bf16.msra.mxu0 0
    %413 = vmatprep.subr.bf16.mxu0 0
    %414 = vmatpush1.bf16.msra.mxu0 0
    %415 = vmatprep.subr.bf16.mxu0 0
    %416 = vmatpush1.bf16.msra.mxu0 0
    %417 = vmatprep.subr.bf16.mxu0 0
    %418 = vmatpush1.bf16.msra.mxu0 0
    %419 = vmatprep.subr.bf16.mxu0 0
    %420 = vmatpush1.bf16.msra.mxu0 0
    %421 = vmatprep.subr.bf16.mxu0 0
    %422 = vmatpush1.bf16.msra.mxu0 0
    %423 = vmatprep.subr.bf16.mxu0 0
    %424 = vmatpush1.bf16.msra.mxu0 0
    %425 = vmatprep.subr.bf16.mxu0 0
    %426 = vmatpush1.bf16.msra.mxu0 0
    %427 = vmatprep.subr.bf16.mxu0 0
    %428 = vmatpush1.bf16.msra.mxu0 0
    %429 = vmatprep.subr.bf16.mxu0 0
    %430 = vmatpush1.bf16.msra.mxu0 0
    %431 = vmatprep.subr.bf16.mxu0 0
    %432 = vmatpush1.bf16.msra.mxu0 0
    %433 = vmatprep.subr.bf16.mxu0 0
    %434 = vmatpush1.bf16.msra.mxu0 0
    %435 = vmatprep.subr.bf16.mxu0 0
    %436 = vmatpush1.bf16.msra.mxu0 0
    %437 = vmatprep.mubr.bf16.mxu0 0
    %438 = vmatmul.mubr.bf16.gmra.mrb[0].mxu0 %v306
    %v439 = vpop.f32.mrb[0].mxu0
    %v440 = vadd.f32 0.0, %v439
    %v441 = vpop.f32.mrb[0].mxu0
    %v442 = vpop.f32.mrb[0].mxu0
    %v443 = vadd.f32 0.0, %v442
    %v444 = vpop.f32.mrb[0].mxu0
    %445 = vmatprep.mubr.bf16.mxu0 0
    %446 = vmatmul.mubr.bf16.gmra.mrb[0].mxu0 %v309
    %v447 = vpop.f32.mrb[0].mxu0
    %v448 = vadd.f32 0.0, %v447
    %v449 = vpop.f32.mrb[0].mxu0
    %v450 = vpop.f32.mrb[0].mxu0
    %v451 = vadd.f32 0.0, %v450
    %v452 = vpop.f32.mrb[0].mxu0
    %453 = vmatprep.mubr.bf16.mxu0 0
    %454 = vmatmul.mubr.bf16.gmra.mrb[0].mxu0 %v312
    %v455 = vpop.f32.mrb[0].mxu0
    %v456 = vadd.f32 0.0, %v455
    %v457 = vpop.f32.mrb[0].mxu0
    %v458 = vpop.f32.mrb[0].mxu0
    %v459 = vadd.f32 0.0, %v458
    %v460 = vpop.f32.mrb[0].mxu0
    %461 = vmatprep.mubr.bf16.mxu0 0
    %462 = vmatmul.mubr.bf16.gmra.mrb[0].mxu0 %v315
    %v463 = vpop.f32.mrb[0].mxu0
    %v464 = vadd.f32 0.0, %v463
    %v465 = vpop.f32.mrb[0].mxu0
    %v466 = vpop.f32.mrb[0].mxu0
    %v467 = vadd.f32 0.0, %v466
    %v468 = vpop.f32.mrb[0].mxu0
    %469 = vmatprep.mubr.bf16.mxu0 0
    %470 = vmatmul.mubr.bf16.gmra.mrb[0].mxu0 %v318
    %v471 = vpop.f32.mrb[0].mxu0
    %v472 = vadd.f32 0.0, %v471
    %v473 = vpop.f32.mrb[0].mxu0
    %v474 = vpop.f32.mrb[0].mxu0
    %v475 = vadd.f32 0.0, %v474
    %v476 = vpop.f32.mrb[0].mxu0
    %477 = vmatprep.mubr.bf16.mxu0 0
    %478 = vmatmul.mubr.bf16.gmra.mrb[0].mxu0 %v321
    %v479 = vpop.f32.mrb[0].mxu0
    %v480 = vadd.f32 0.0, %v479
    %v481 = vpop.f32.mrb[0].mxu0
    %v482 = vpop.f32.mrb[0].mxu0
    %v483 = vadd.f32 0.0, %v482
    %v484 = vpop.f32.mrb[0].mxu0
    %485 = vmatprep.mubr.bf16.mxu0 0
    %486 = vmatmul.mubr.bf16.gmra.mrb[0].mxu0 %v324
    %v487 = vpop.f32.mrb[0].mxu0
    %v488 = vadd.f32 0.0, %v487
    %v489 = vpop.f32.mrb[0].mxu0
    %v490 = vpop.f32.mrb[0].mxu0
    %v491 = vadd.f32 0.0, %v490
    %v492 = vpop.f32.mrb[0].mxu0
    %493 = vmatprep.mubr.bf16.mxu0 0
    %494 = vmatmul.mubr.bf16.gmra.mrb[0].mxu0 %v327
    %v495 = vpop.f32.mrb[0].mxu0
    %v496 = vadd.f32 0.0, %v495
    %v497 = vpop.f32.mrb[0].mxu0
    %v498 = vpop.f32.mrb[0].mxu0
    %v499 = vadd.f32 0.0, %v498
    %v500 = vpop.f32.mrb[0].mxu0
    %501 = vmatprep.mubr.bf16.mxu0 0
    %502 = vmatmul.mubr.bf16.gmra.mrb[0].mxu0 %v330
    %v503 = vpop.f32.mrb[0].mxu0
    %v504 = vadd.f32 0.0, %v503
    %v505 = vpop.f32.mrb[0].mxu0
    %v506 = vpop.f32.mrb[0].mxu0
    %v507 = vadd.f32 0.0, %v506
    %v508 = vpop.f32.mrb[0].mxu0
    %509 = vmatprep.mubr.bf16.mxu0 0
    %510 = vmatmul.mubr.bf16.gmra.mrb[0].mxu0 %v333
    %v511 = vpop.f32.mrb[0].mxu0
    %v512 = vadd.f32 0.0, %v511
    %v513 = vpop.f32.mrb[0].mxu0
    %v514 = vpop.f32.mrb[0].mxu0
    %v515 = vadd.f32 0.0, %v514
    %v516 = vpop.f32.mrb[0].mxu0
    %517 = vmatprep.mubr.bf16.mxu0 0
    %518 = vmatmul.mubr.bf16.gmra.mrb[0].mxu0 %v336
    %v519 = vpop.f32.mrb[0].mxu0
    %v520 = vadd.f32 0.0, %v519
    %v521 = vpop.f32.mrb[0].mxu0
    %v522 = vpop.f32.mrb[0].mxu0
    %v523 = vadd.f32 0.0, %v522
    %v524 = vpop.f32.mrb[0].mxu0
    %525 = vmatprep.mubr.bf16.mxu0 0
    %526 = vmatmul.mubr.bf16.gmra.mrb[0].mxu0 %v339
    %v527 = vpop.f32.mrb[0].mxu0
    %v528 = vadd.f32 0.0, %v527
    %v529 = vpop.f32.mrb[0].mxu0
    %v530 = vpop.f32.mrb[0].mxu0
    %v531 = vadd.f32 0.0, %v530
    %v532 = vpop.f32.mrb[0].mxu0
    %533 = vmatprep.mubr.bf16.mxu0 0
    %534 = vmatmul.mubr.bf16.gmra.mrb[0].mxu0 %v342
    %v535 = vpop.f32.mrb[0].mxu0
    %v536 = vadd.f32 0.0, %v535
    %v537 = vpop.f32.mrb[0].mxu0
    %v538 = vpop.f32.mrb[0].mxu0
    %v539 = vadd.f32 0.0, %v538
    %v540 = vpop.f32.mrb[0].mxu0
    %541 = vmatprep.mubr.bf16.mxu0 0
    %542 = vmatmul.mubr.bf16.gmra.mrb[0].mxu0 %v345
    %v543 = vpop.f32.mrb[0].mxu0
    %v544 = vadd.f32 0.0, %v543
    %v545 = vpop.f32.mrb[0].mxu0
    %v546 = vpop.f32.mrb[0].mxu0
    %v547 = vadd.f32 0.0, %v546
    %v548 = vpop.f32.mrb[0].mxu0
    %549 = vmatprep.mubr.bf16.mxu0 0
    %550 = vmatmul.mubr.bf16.gmra.mrb[0].mxu0 %v348
    %v551 = vpop.f32.mrb[0].mxu0
    %v552 = vadd.f32 0.0, %v551
    %v553 = vpop.f32.mrb[0].mxu0
    %v554 = vpop.f32.mrb[0].mxu0
    %v555 = vadd.f32 0.0, %v554
    %v556 = vpop.f32.mrb[0].mxu0
    %557 = vmatprep.mubr.bf16.mxu0 0
    %558 = vmatmul.mubr.bf16.gmra.mrb[0].mxu0 %v351
    %v559 = vpop.f32.mrb[0].mxu0
    %v560 = vadd.f32 0.0, %v559
    %v561 = vpop.f32.mrb[0].mxu0
    %v562 = vpop.f32.mrb[0].mxu0
    %v563 = vadd.f32 0.0, %v562
    %v564 = vpop.f32.mrb[0].mxu0
    %565 = vmatprep.mubr.bf16.mxu0 0
    %566 = vmatmul.mubr.bf16.gmra.mrb[0].mxu0 %v354
    %v567 = vpop.f32.mrb[0].mxu0
    %v568 = vadd.f32 0.0, %v567
    %v569 = vpop.f32.mrb[0].mxu0
    %v570 = vpop.f32.mrb[0].mxu0
    %v571 = vadd.f32 0.0, %v570
    %v572 = vpop.f32.mrb[0].mxu0
    %573 = vmatprep.mubr.bf16.mxu0 0
    %574 = vmatmul.mubr.bf16.gmra.mrb[0].mxu0 %v357
    %v575 = vpop.f32.mrb[0].mxu0
    %v576 = vadd.f32 0.0, %v575
    %v577 = vpop.f32.mrb[0].mxu0
    %v578 = vpop.f32.mrb[0].mxu0
    %v579 = vadd.f32 0.0, %v578
    %v580 = vpop.f32.mrb[0].mxu0
    %581 = vmatprep.mubr.bf16.mxu0 0
    %582 = vmatmul.mubr.bf16.gmra.mrb[0].mxu0 %v360
    %v583 = vpop.f32.mrb[0].mxu0
    %v584 = vadd.f32 0.0, %v583
    %v585 = vpop.f32.mrb[0].mxu0
    %v586 = vpop.f32.mrb[0].mxu0
    %v587 = vadd.f32 0.0, %v586
    %v588 = vpop.f32.mrb[0].mxu0
    %589 = vmatprep.mubr.bf16.mxu0 0
    %590 = vmatmul.mubr.bf16.gmra.mrb[0].mxu0 %v363
    %v591 = vpop.f32.mrb[0].mxu0
    %v592 = vadd.f32 0.0, %v591
    %v593 = vpop.f32.mrb[0].mxu0
    %v594 = vpop.f32.mrb[0].mxu0
    %v595 = vadd.f32 0.0, %v594
    %v596 = vpop.f32.mrb[0].mxu0
    %597 = vmatprep.mubr.bf16.mxu0 0
    %598 = vmatmul.mubr.bf16.gmra.mrb[0].mxu0 %v366
    %v599 = vpop.f32.mrb[0].mxu0
    %v600 = vadd.f32 0.0, %v599
    %v601 = vpop.f32.mrb[0].mxu0
    %v602 = vpop.f32.mrb[0].mxu0
    %v603 = vadd.f32 0.0, %v602
    %v604 = vpop.f32.mrb[0].mxu0
    %605 = vmatprep.mubr.bf16.mxu0 0
    %606 = vmatmul.mubr.bf16.gmra.mrb[0].mxu0 %v369
    %v607 = vpop.f32.mrb[0].mxu0
    %v608 = vadd.f32 0.0, %v607
    %v609 = vpop.f32.mrb[0].mxu0
    %v610 = vpop.f32.mrb[0].mxu0
    %v611 = vadd.f32 0.0, %v610
    %v612 = vpop.f32.mrb[0].mxu0
    %613 = vmatprep.mubr.bf16.mxu0 0
    %614 = vmatmul.mubr.bf16.gmra.mrb[0].mxu0 %v372
    %v615 = vpop.f32.mrb[0].mxu0
    %v616 = vadd.f32 0.0, %v615
    %v617 = vpop.f32.mrb[0].mxu0
    %v618 = vpop.f32.mrb[0].mxu0
    %v619 = vadd.f32 0.0, %v618
    %v620 = vpop.f32.mrb[0].mxu0
    %621 = vmatprep.mubr.bf16.mxu0 0
    %622 = vmatmul.mubr.bf16.gmra.mrb[0].mxu0 %v375
    %v623 = vpop.f32.mrb[0].mxu0
    %v624 = vadd.f32 0.0, %v623
    %v625 = vpop.f32.mrb[0].mxu0
    %v626 = vpop.f32.mrb[0].mxu0
    %v627 = vadd.f32 0.0, %v626
    %v628 = vpop.f32.mrb[0].mxu0
    %629 = vmatprep.mubr.bf16.mxu0 0
    %630 = vmatmul.mubr.bf16.gmra.mrb[0].mxu0 %v378
    %v631 = vpop.f32.mrb[0].mxu0
    %v632 = vadd.f32 0.0, %v631
    %v633 = vpop.f32.mrb[0].mxu0
    %v634 = vpop.f32.mrb[0].mxu0
    %v635 = vadd.f32 0.0, %v634
    %v636 = vpop.f32.mrb[0].mxu0
    %637 = vmatprep.mubr.bf16.mxu0 0
    %638 = vmatmul.mubr.bf16.gmra.mrb[0].mxu0 %v381
    %v639 = vpop.f32.mrb[0].mxu0
    %v640 = vadd.f32 0.0, %v639
    %v641 = vpop.f32.mrb[0].mxu0
    %v642 = vpop.f32.mrb[0].mxu0
    %v643 = vadd.f32 0.0, %v642
    %v644 = vpop.f32.mrb[0].mxu0
    %645 = vmatprep.mubr.bf16.mxu0 0
    %646 = vmatmul.mubr.bf16.gmra.mrb[0].mxu0 %v384
    %v647 = vpop.f32.mrb[0].mxu0
    %v648 = vadd.f32 0.0, %v647
    %v649 = vpop.f32.mrb[0].mxu0
    %v650 = vpop.f32.mrb[0].mxu0
    %v651 = vadd.f32 0.0, %v650
    %v652 = vpop.f32.mrb[0].mxu0
    %653 = vmatprep.mubr.bf16.mxu0 0
    %654 = vmatmul.mubr.bf16.gmra.mrb[0].mxu0 %v387
    %v655 = vpop.f32.mrb[0].mxu0
    %v656 = vadd.f32 0.0, %v655
    %v657 = vpop.f32.mrb[0].mxu0
    %v658 = vpop.f32.mrb[0].mxu0
    %v659 = vadd.f32 0.0, %v658
    %v660 = vpop.f32.mrb[0].mxu0
    %661 = vmatprep.mubr.bf16.mxu0 0
    %662 = vmatmul.mubr.bf16.gmra.mrb[0].mxu0 %v390
    %v663 = vpop.f32.mrb[0].mxu0
    %v664 = vadd.f32 0.0, %v663
    %v665 = vpop.f32.mrb[0].mxu0
    %v666 = vpop.f32.mrb[0].mxu0
    %v667 = vadd.f32 0.0, %v666
    %v668 = vpop.f32.mrb[0].mxu0
    %669 = vmatprep.mubr.bf16.mxu0 0
    %670 = vmatmul.mubr.bf16.gmra.mrb[0].mxu0 %v393
    %v671 = vpop.f32.mrb[0].mxu0
    %v672 = vadd.f32 0.0, %v671
    %v673 = vpop.f32.mrb[0].mxu0
    %v674 = vpop.f32.mrb[0].mxu0
    %v675 = vadd.f32 0.0, %v674
    %v676 = vpop.f32.mrb[0].mxu0
    %677 = vmatprep.mubr.bf16.mxu0 0
    %678 = vmatmul.mubr.bf16.gmra.mrb[0].mxu0 %v396
    %v679 = vpop.f32.mrb[0].mxu0
    %v680 = vadd.f32 0.0, %v679
    %v681 = vpop.f32.mrb[0].mxu0
    %v682 = vpop.f32.mrb[0].mxu0
    %v683 = vadd.f32 0.0, %v682
    %v684 = vpop.f32.mrb[0].mxu0
    %685 = vmatprep.mubr.bf16.mxu0 0
    %686 = vmatmul.mubr.bf16.gmra.mrb[0].mxu0 %v399
    %v687 = vpop.f32.mrb[0].mxu0
    %v688 = vadd.f32 0.0, %v687
    %v689 = vpop.f32.mrb[0].mxu0
    %v690 = vpop.f32.mrb[0].mxu0
    %v691 = vadd.f32 0.0, %v690
    %v692 = vpop.f32.mrb[0].mxu0
    %693 = vdwg.mxu0
    %v694 = vpack.c.bf16 %v443, %v440
    %v695 = vpack.c.bf16 %v451, %v448
    %v696 = vpack.c.bf16 %v459, %v456
    %v697 = vpack.c.bf16 %v467, %v464
    %v698 = vpack.c.bf16 %v475, %v472
    %v699 = vpack.c.bf16 %v483, %v480
    %v700 = vpack.c.bf16 %v491, %v488
    %v701 = vpack.c.bf16 %v499, %v496
    %v702 = vpack.c.bf16 %v507, %v504
    %v703 = vpack.c.bf16 %v515, %v512
    %v704 = vpack.c.bf16 %v523, %v520
    %v705 = vpack.c.bf16 %v531, %v528
    %v706 = vpack.c.bf16 %v539, %v536
    %v707 = vpack.c.bf16 %v547, %v544
    %v708 = vpack.c.bf16 %v555, %v552
    %v709 = vpack.c.bf16 %v563, %v560
    %v710 = vpack.c.bf16 %v571, %v568
    %v711 = vpack.c.bf16 %v579, %v576
    %v712 = vpack.c.bf16 %v587, %v584
    %v713 = vpack.c.bf16 %v595, %v592
    %v714 = vpack.c.bf16 %v603, %v600
    %v715 = vpack.c.bf16 %v611, %v608
    %v716 = vpack.c.bf16 %v619, %v616
    %v717 = vpack.c.bf16 %v627, %v624
    %v718 = vpack.c.bf16 %v635, %v632
    %v719 = vpack.c.bf16 %v643, %v640
    %v720 = vpack.c.bf16 %v651, %v648
    %v721 = vpack.c.bf16 %v659, %v656
    %v722 = vpack.c.bf16 %v667, %v664
    %v723 = vpack.c.bf16 %v675, %v672
    %v724 = vpack.c.bf16 %v683, %v680
    %v725 = vpack.c.bf16 %v691, %v688
    %v758 = vunpack.c.l.b16 %v694
    %v759 = vunpack.c.h.b16 %v694
    %v760 = vunpack.c.l.b16 %v695
    %v761 = vunpack.c.h.b16 %v695
    %v762 = vunpack.c.l.b16 %v696
    %v763 = vunpack.c.h.b16 %v696
    %v764 = vunpack.c.l.b16 %v697
    %v765 = vunpack.c.h.b16 %v697
    %v766 = vunpack.c.l.b16 %v698
    %v767 = vunpack.c.h.b16 %v698
    %v768 = vunpack.c.l.b16 %v699
    %v769 = vunpack.c.h.b16 %v699
    %v770 = vunpack.c.l.b16 %v700
    %v771 = vunpack.c.h.b16 %v700
    %v772 = vunpack.c.l.b16 %v701
    %v773 = vunpack.c.h.b16 %v701
    %v774 = vunpack.c.l.b16 %v702
    %v775 = vunpack.c.h.b16 %v702
    %v776 = vunpack.c.l.b16 %v703
    %v777 = vunpack.c.h.b16 %v703
    %v778 = vunpack.c.l.b16 %v704
    %v779 = vunpack.c.h.b16 %v704
    %v780 = vunpack.c.l.b16 %v705
    %v781 = vunpack.c.h.b16 %v705
    %v782 = vunpack.c.l.b16 %v706
    %v783 = vunpack.c.h.b16 %v706
    %v784 = vunpack.c.l.b16 %v707
    %v785 = vunpack.c.h.b16 %v707
    %v786 = vunpack.c.l.b16 %v708
    %v787 = vunpack.c.h.b16 %v708
    %v788 = vunpack.c.l.b16 %v709
    %v789 = vunpack.c.h.b16 %v709
    %v790 = vunpack.c.l.b16 %v710
    %v791 = vunpack.c.h.b16 %v710
    %v792 = vunpack.c.l.b16 %v711
    %v793 = vunpack.c.h.b16 %v711
    %v794 = vunpack.c.l.b16 %v712
    %v795 = vunpack.c.h.b16 %v712
    %v796 = vunpack.c.l.b16 %v713
    %v797 = vunpack.c.h.b16 %v713
    %v798 = vunpack.c.l.b16 %v714
    %v799 = vunpack.c.h.b16 %v714
    %v800 = vunpack.c.l.b16 %v715
    %v801 = vunpack.c.h.b16 %v715
    %v802 = vunpack.c.l.b16 %v716
    %v803 = vunpack.c.h.b16 %v716
    %v804 = vunpack.c.l.b16 %v717
    %v805 = vunpack.c.h.b16 %v717
    %v806 = vunpack.c.l.b16 %v718
    %v807 = vunpack.c.h.b16 %v718
    %v808 = vunpack.c.l.b16 %v719
    %v809 = vunpack.c.h.b16 %v719
    %v810 = vunpack.c.l.b16 %v720
    %v811 = vunpack.c.h.b16 %v720
    %v812 = vunpack.c.l.b16 %v721
    %v813 = vunpack.c.h.b16 %v721
    %v814 = vunpack.c.l.b16 %v722
    %v815 = vunpack.c.h.b16 %v722
    %v816 = vunpack.c.l.b16 %v723
    %v817 = vunpack.c.h.b16 %v723
    %v818 = vunpack.c.l.b16 %v724
    %v819 = vunpack.c.h.b16 %v724
    %v820 = vunpack.c.l.b16 %v725
    %v821 = vunpack.c.h.b16 %v725
    %v822 = vpack.c.b16 %v758, %v758
    %v823 = vpack.c.b16 %v759, %v759
    %v824 = vpack.c.b16 %v760, %v760
    %v825 = vpack.c.b16 %v761, %v761
    %v826 = vpack.c.b16 %v762, %v762
    %v827 = vpack.c.b16 %v763, %v763
    %v828 = vpack.c.b16 %v764, %v764
    %v829 = vpack.c.b16 %v765, %v765
    %v830 = vpack.c.b16 %v766, %v766
    %v831 = vpack.c.b16 %v767, %v767
    %v832 = vpack.c.b16 %v768, %v768
    %v833 = vpack.c.b16 %v769, %v769
    %v834 = vpack.c.b16 %v770, %v770
    %v835 = vpack.c.b16 %v771, %v771
    %v836 = vpack.c.b16 %v772, %v772
    %v837 = vpack.c.b16 %v773, %v773
    %v838 = vpack.c.b16 %v774, %v774
    %v839 = vpack.c.b16 %v775, %v775
    %v840 = vpack.c.b16 %v776, %v776
    %v841 = vpack.c.b16 %v777, %v777
    %v842 = vpack.c.b16 %v778, %v778
    %v843 = vpack.c.b16 %v779, %v779
    %v844 = vpack.c.b16 %v780, %v780
    %v845 = vpack.c.b16 %v781, %v781
    %v846 = vpack.c.b16 %v782, %v782
    %v847 = vpack.c.b16 %v783, %v783
    %v848 = vpack.c.b16 %v784, %v784
    %v849 = vpack.c.b16 %v785, %v785
    %v850 = vpack.c.b16 %v786, %v786
    %v851 = vpack.c.b16 %v787, %v787
    %v852 = vpack.c.b16 %v788, %v788
    %v853 = vpack.c.b16 %v789, %v789
    %v854 = vpack.c.b16 %v790, %v790
    %v855 = vpack.c.b16 %v791, %v791
    %v856 = vpack.c.b16 %v792, %v792
    %v857 = vpack.c.b16 %v793, %v793
    %v858 = vpack.c.b16 %v794, %v794
    %v859 = vpack.c.b16 %v795, %v795
    %v860 = vpack.c.b16 %v796, %v796
    %v861 = vpack.c.b16 %v797, %v797
    %v862 = vpack.c.b16 %v798, %v798
    %v863 = vpack.c.b16 %v799, %v799
    %v864 = vpack.c.b16 %v800, %v800
    %v865 = vpack.c.b16 %v801, %v801
    %v866 = vpack.c.b16 %v802, %v802
    %v867 = vpack.c.b16 %v803, %v803
    %v868 = vpack.c.b16 %v804, %v804
    %v869 = vpack.c.b16 %v805, %v805
    %v870 = vpack.c.b16 %v806, %v806
    %v871 = vpack.c.b16 %v807, %v807
    %v872 = vpack.c.b16 %v808, %v808
    %v873 = vpack.c.b16 %v809, %v809
    %v874 = vpack.c.b16 %v810, %v810
    %v875 = vpack.c.b16 %v811, %v811
    %v876 = vpack.c.b16 %v812, %v812
    %v877 = vpack.c.b16 %v813, %v813
    %v878 = vpack.c.b16 %v814, %v814
    %v879 = vpack.c.b16 %v815, %v815
    %v880 = vpack.c.b16 %v816, %v816
    %v881 = vpack.c.b16 %v817, %v817
    %v882 = vpack.c.b16 %v818, %v818
    %v883 = vpack.c.b16 %v819, %v819
    %v884 = vpack.c.b16 %v820, %v820
    %v885 = vpack.c.b16 %v821, %v821
    %vm950 = vcmask 60416
    %951 = vst.msk [vmem:[%s2] sm:$0xf] %vm950, %v822
    %952 = vst.msk [vmem:[%s2 + $0x4] sm:$0xf] %vm950, %v823
    %953 = vst.msk [vmem:[%s2 + $0x8] sm:$0xf] %vm950, %v824
    %954 = vst.msk [vmem:[%s2 + $0xc] sm:$0xf] %vm950, %v825
    %955 = vst.msk [vmem:[%s2 + $0x10] sm:$0xf] %vm950, %v826
    %956 = vst.msk [vmem:[%s2 + $0x14] sm:$0xf] %vm950, %v827
    %957 = vst.msk [vmem:[%s2 + $0x18] sm:$0xf] %vm950, %v828
    %958 = vst.msk [vmem:[%s2 + $0x1c] sm:$0xf] %vm950, %v829
    %959 = vst.msk [vmem:[%s2 + $0x20] sm:$0xf] %vm950, %v830
    %960 = vst.msk [vmem:[%s2 + $0x24] sm:$0xf] %vm950, %v831
    %961 = vst.msk [vmem:[%s2 + $0x28] sm:$0xf] %vm950, %v832
    %962 = vst.msk [vmem:[%s2 + $0x2c] sm:$0xf] %vm950, %v833
    %963 = vst.msk [vmem:[%s2 + $0x30] sm:$0xf] %vm950, %v834
    %964 = vst.msk [vmem:[%s2 + $0x34] sm:$0xf] %vm950, %v835
    %965 = vst.msk [vmem:[%s2 + $0x38] sm:$0xf] %vm950, %v836
    %966 = vst.msk [vmem:[%s2 + $0x3c] sm:$0xf] %vm950, %v837
    %967 = vst.msk [vmem:[%s2 + $0x40] sm:$0xf] %vm950, %v838
    %968 = vst.msk [vmem:[%s2 + $0x44] sm:$0xf] %vm950, %v839
    %969 = vst.msk [vmem:[%s2 + $0x48] sm:$0xf] %vm950, %v840
    %970 = vst.msk [vmem:[%s2 + $0x4c] sm:$0xf] %vm950, %v841
    %971 = vst.msk [vmem:[%s2 + $0x50] sm:$0xf] %vm950, %v842
    %972 = vst.msk [vmem:[%s2 + $0x54] sm:$0xf] %vm950, %v843
    %973 = vst.msk [vmem:[%s2 + $0x58] sm:$0xf] %vm950, %v844
    %974 = vst.msk [vmem:[%s2 + $0x5c] sm:$0xf] %vm950, %v845
    %975 = vst.msk [vmem:[%s2 + $0x60] sm:$0xf] %vm950, %v846
    %976 = vst.msk [vmem:[%s2 + $0x64] sm:$0xf] %vm950, %v847
    %977 = vst.msk [vmem:[%s2 + $0x68] sm:$0xf] %vm950, %v848
    %978 = vst.msk [vmem:[%s2 + $0x6c] sm:$0xf] %vm950, %v849
    %979 = vst.msk [vmem:[%s2 + $0x70] sm:$0xf] %vm950, %v850
    %980 = vst.msk [vmem:[%s2 + $0x74] sm:$0xf] %vm950, %v851
    %981 = vst.msk [vmem:[%s2 + $0x78] sm:$0xf] %vm950, %v852
    %982 = vst.msk [vmem:[%s2 + $0x7c] sm:$0xf] %vm950, %v853
    %983 = vst.msk [vmem:[%s2 + $0x80] sm:$0xf] %vm950, %v854
    %984 = vst.msk [vmem:[%s2 + $0x84] sm:$0xf] %vm950, %v855
    %985 = vst.msk [vmem:[%s2 + $0x88] sm:$0xf] %vm950, %v856
    %986 = vst.msk [vmem:[%s2 + $0x8c] sm:$0xf] %vm950, %v857
    %987 = vst.msk [vmem:[%s2 + $0x90] sm:$0xf] %vm950, %v858
    %988 = vst.msk [vmem:[%s2 + $0x94] sm:$0xf] %vm950, %v859
    %989 = vst.msk [vmem:[%s2 + $0x98] sm:$0xf] %vm950, %v860
    %990 = vst.msk [vmem:[%s2 + $0x9c] sm:$0xf] %vm950, %v861
    %991 = vst.msk [vmem:[%s2 + $0xa0] sm:$0xf] %vm950, %v862
    %992 = vst.msk [vmem:[%s2 + $0xa4] sm:$0xf] %vm950, %v863
    %993 = vst.msk [vmem:[%s2 + $0xa8] sm:$0xf] %vm950, %v864
    %994 = vst.msk [vmem:[%s2 + $0xac] sm:$0xf] %vm950, %v865
    %995 = vst.msk [vmem:[%s2 + $0xb0] sm:$0xf] %vm950, %v866
    %996 = vst.msk [vmem:[%s2 + $0xb4] sm:$0xf] %vm950, %v867
    %997 = vst.msk [vmem:[%s2 + $0xb8] sm:$0xf] %vm950, %v868
    %998 = vst.msk [vmem:[%s2 + $0xbc] sm:$0xf] %vm950, %v869
    %999 = vst.msk [vmem:[%s2 + $0xc0] sm:$0xf] %vm950, %v870
    %1000 = vst.msk [vmem:[%s2 + $0xc4] sm:$0xf] %vm950, %v871
    %1001 = vst.msk [vmem:[%s2 + $0xc8] sm:$0xf] %vm950, %v872
    %1002 = vst.msk [vmem:[%s2 + $0xcc] sm:$0xf] %vm950, %v873
    %1003 = vst.msk [vmem:[%s2 + $0xd0] sm:$0xf] %vm950, %v874
    %1004 = vst.msk [vmem:[%s2 + $0xd4] sm:$0xf] %vm950, %v875
    %1005 = vst.msk [vmem:[%s2 + $0xd8] sm:$0xf] %vm950, %v876
    %1006 = vst.msk [vmem:[%s2 + $0xdc] sm:$0xf] %vm950, %v877
    %1007 = vst.msk [vmem:[%s2 + $0xe0] sm:$0xf] %vm950, %v878
    %1008 = vst.msk [vmem:[%s2 + $0xe4] sm:$0xf] %vm950, %v879
    %1009 = vst.msk [vmem:[%s2 + $0xe8] sm:$0xf] %vm950, %v880
    %1010 = vst.msk [vmem:[%s2 + $0xec] sm:$0xf] %vm950, %v881
    %1011 = vst.msk [vmem:[%s2 + $0xf0] sm:$0xf] %vm950, %v882
    %1012 = vst.msk [vmem:[%s2 + $0xf4] sm:$0xf] %vm950, %v883
    %1013 = vst.msk [vmem:[%s2 + $0xf8] sm:$0xf] %vm950, %v884
    %1014 = vst.msk [vmem:[%s2 + $0xfc] sm:$0xf] %vm950, %v885
    %vm1015 = vcmask 64512
    %v1016 = vsel %vm1015, %v440, 0.0
    %v1017 = vsel %vm1015, %v443, 0.0
    %v1018 = vadd.f32 %v1016, %v1017
    %v1019 = vsel %vm1015, %v448, 0.0
    %v1020 = vadd.f32 %v1018, %v1019
    %v1021 = vsel %vm1015, %v451, 0.0
    %v1022 = vadd.f32 %v1020, %v1021
    %v1023 = vsel %vm1015, %v456, 0.0
    %v1024 = vadd.f32 %v1022, %v1023
    %v1025 = vsel %vm1015, %v459, 0.0
    %v1026 = vadd.f32 %v1024, %v1025
    %v1027 = vsel %vm1015, %v464, 0.0
    %v1028 = vadd.f32 %v1026, %v1027
    %v1029 = vsel %vm1015, %v467, 0.0
    %v1030 = vadd.f32 %v1028, %v1029
    %v1031 = vsel %vm1015, %v472, 0.0
    %v1032 = vadd.f32 %v1030, %v1031
    %v1033 = vsel %vm1015, %v475, 0.0
    %v1034 = vadd.f32 %v1032, %v1033
    %v1035 = vsel %vm1015, %v480, 0.0
    %v1036 = vadd.f32 %v1034, %v1035
    %v1037 = vsel %vm1015, %v483, 0.0
    %v1038 = vadd.f32 %v1036, %v1037
    %v1039 = vsel %vm1015, %v488, 0.0
    %v1040 = vadd.f32 %v1038, %v1039
    %v1041 = vsel %vm1015, %v491, 0.0
    %v1042 = vadd.f32 %v1040, %v1041
    %v1043 = vsel %vm1015, %v496, 0.0
    %v1044 = vadd.f32 %v1042, %v1043
    %v1045 = vsel %vm1015, %v499, 0.0
    %v1046 = vadd.f32 %v1044, %v1045
    %v1047 = vsel %vm1015, %v504, 0.0
    %v1048 = vadd.f32 %v1046, %v1047
    %v1049 = vsel %vm1015, %v507, 0.0
    %v1050 = vadd.f32 %v1048, %v1049
    %v1051 = vsel %vm1015, %v512, 0.0
    %v1052 = vadd.f32 %v1050, %v1051
    %v1053 = vsel %vm1015, %v515, 0.0
    %v1054 = vadd.f32 %v1052, %v1053
    %v1055 = vsel %vm1015, %v520, 0.0
    %v1056 = vadd.f32 %v1054, %v1055
    %v1057 = vsel %vm1015, %v523, 0.0
    %v1058 = vadd.f32 %v1056, %v1057
    %v1059 = vsel %vm1015, %v528, 0.0
    %v1060 = vadd.f32 %v1058, %v1059
    %v1061 = vsel %vm1015, %v531, 0.0
    %v1062 = vadd.f32 %v1060, %v1061
    %v1063 = vsel %vm1015, %v536, 0.0
    %v1064 = vadd.f32 %v1062, %v1063
    %v1065 = vsel %vm1015, %v539, 0.0
    %v1066 = vadd.f32 %v1064, %v1065
    %v1067 = vsel %vm1015, %v544, 0.0
    %v1068 = vadd.f32 %v1066, %v1067
    %v1069 = vsel %vm1015, %v547, 0.0
    %v1070 = vadd.f32 %v1068, %v1069
    %v1071 = vsel %vm1015, %v552, 0.0
    %v1072 = vadd.f32 %v1070, %v1071
    %v1073 = vsel %vm1015, %v555, 0.0
    %v1074 = vadd.f32 %v1072, %v1073
    %v1075 = vsel %vm1015, %v560, 0.0
    %v1076 = vadd.f32 %v1074, %v1075
    %v1077 = vsel %vm1015, %v563, 0.0
    %v1078 = vadd.f32 %v1076, %v1077
    %v1079 = vsel %vm1015, %v568, 0.0
    %v1080 = vadd.f32 %v1078, %v1079
    %v1081 = vsel %vm1015, %v571, 0.0
    %v1082 = vadd.f32 %v1080, %v1081
    %v1083 = vsel %vm1015, %v576, 0.0
    %v1084 = vadd.f32 %v1082, %v1083
    %v1085 = vsel %vm1015, %v579, 0.0
    %v1086 = vadd.f32 %v1084, %v1085
    %v1087 = vsel %vm1015, %v584, 0.0
    %v1088 = vadd.f32 %v1086, %v1087
    %v1089 = vsel %vm1015, %v587, 0.0
    %v1090 = vadd.f32 %v1088, %v1089
    %v1091 = vsel %vm1015, %v592, 0.0
    %v1092 = vadd.f32 %v1090, %v1091
    %v1093 = vsel %vm1015, %v595, 0.0
    %v1094 = vadd.f32 %v1092, %v1093
    %v1095 = vsel %vm1015, %v600, 0.0
    %v1096 = vadd.f32 %v1094, %v1095
    %v1097 = vsel %vm1015, %v603, 0.0
    %v1098 = vadd.f32 %v1096, %v1097
    %v1099 = vsel %vm1015, %v608, 0.0
    %v1100 = vadd.f32 %v1098, %v1099
    %v1101 = vsel %vm1015, %v611, 0.0
    %v1102 = vadd.f32 %v1100, %v1101
    %v1103 = vsel %vm1015, %v616, 0.0
    %v1104 = vadd.f32 %v1102, %v1103
    %v1105 = vsel %vm1015, %v619, 0.0
    %v1106 = vadd.f32 %v1104, %v1105
    %v1107 = vsel %vm1015, %v624, 0.0
    %v1108 = vadd.f32 %v1106, %v1107
    %v1109 = vsel %vm1015, %v627, 0.0
    %v1110 = vadd.f32 %v1108, %v1109
    %v1111 = vsel %vm1015, %v632, 0.0
    %v1112 = vadd.f32 %v1110, %v1111
    %v1113 = vsel %vm1015, %v635, 0.0
    %v1114 = vadd.f32 %v1112, %v1113
    %v1115 = vsel %vm1015, %v640, 0.0
    %v1116 = vadd.f32 %v1114, %v1115
    %v1117 = vsel %vm1015, %v643, 0.0
    %v1118 = vadd.f32 %v1116, %v1117
    %v1119 = vsel %vm1015, %v648, 0.0
    %v1120 = vadd.f32 %v1118, %v1119
    %v1121 = vsel %vm1015, %v651, 0.0
    %v1122 = vadd.f32 %v1120, %v1121
    %v1123 = vsel %vm1015, %v656, 0.0
    %v1124 = vadd.f32 %v1122, %v1123
    %v1125 = vsel %vm1015, %v659, 0.0
    %v1126 = vadd.f32 %v1124, %v1125
    %v1127 = vsel %vm1015, %v664, 0.0
    %v1128 = vadd.f32 %v1126, %v1127
    %v1129 = vsel %vm1015, %v667, 0.0
    %v1130 = vadd.f32 %v1128, %v1129
    %v1131 = vsel %vm1015, %v672, 0.0
    %v1132 = vadd.f32 %v1130, %v1131
    %v1133 = vsel %vm1015, %v675, 0.0
    %v1134 = vadd.f32 %v1132, %v1133
    %v1135 = vsel %vm1015, %v680, 0.0
    %v1136 = vadd.f32 %v1134, %v1135
    %v1137 = vsel %vm1015, %v683, 0.0
    %v1138 = vadd.f32 %v1136, %v1137
    %v1139 = vsel %vm1015, %v688, 0.0
    %v1140 = vadd.f32 %v1138, %v1139
    %v1141 = vsel %vm1015, %v691, 0.0
    %v1142 = vadd.f32 %v1140, %v1141
    %v1143 = vrot.slane %v1142, 4
    %v1144 = vadd.f32 %v1142, %v1143
    %v1145 = vrot.slane %v1144, 2
    %v1146 = vadd.f32 %v1144, %v1145
    %v1147 = vrot.slane %v1146, 1
    %v1148 = vadd.f32 %v1146, %v1147
    %vm1149 = vcmask 57344
    %1150 = vst.msk [vmem:[#allocation2] sm:$0x1] %vm1149, %v1148
    %v1151 = vmul.f32 %v440, %v440
    %v1152 = vmul.f32 %v443, %v443
    %v1153 = vmul.f32 %v448, %v448
    %v1154 = vmul.f32 %v451, %v451
    %v1155 = vmul.f32 %v456, %v456
    %v1156 = vmul.f32 %v459, %v459
    %v1157 = vmul.f32 %v464, %v464
    %v1158 = vmul.f32 %v467, %v467
    %v1159 = vmul.f32 %v472, %v472
    %v1160 = vmul.f32 %v475, %v475
    %v1161 = vmul.f32 %v480, %v480
    %v1162 = vmul.f32 %v483, %v483
    %v1163 = vmul.f32 %v488, %v488
    %v1164 = vmul.f32 %v491, %v491
    %v1165 = vmul.f32 %v496, %v496
    %v1166 = vmul.f32 %v499, %v499
    %v1167 = vmul.f32 %v504, %v504
    %v1168 = vmul.f32 %v507, %v507
    %v1169 = vmul.f32 %v512, %v512
    %v1170 = vmul.f32 %v515, %v515
    %v1171 = vmul.f32 %v520, %v520
    %v1172 = vmul.f32 %v523, %v523
    %v1173 = vmul.f32 %v528, %v528
    %v1174 = vmul.f32 %v531, %v531
    %v1175 = vmul.f32 %v536, %v536
    %v1176 = vmul.f32 %v539, %v539
    %v1177 = vmul.f32 %v544, %v544
    %v1178 = vmul.f32 %v547, %v547
    %v1179 = vmul.f32 %v552, %v552
    %v1180 = vmul.f32 %v555, %v555
    %v1181 = vmul.f32 %v560, %v560
    %v1182 = vmul.f32 %v563, %v563
    %v1183 = vmul.f32 %v568, %v568
    %v1184 = vmul.f32 %v571, %v571
    %v1185 = vmul.f32 %v576, %v576
    %v1186 = vmul.f32 %v579, %v579
    %v1187 = vmul.f32 %v584, %v584
    %v1188 = vmul.f32 %v587, %v587
    %v1189 = vmul.f32 %v592, %v592
    %v1190 = vmul.f32 %v595, %v595
    %v1191 = vmul.f32 %v600, %v600
    %v1192 = vmul.f32 %v603, %v603
    %v1193 = vmul.f32 %v608, %v608
    %v1194 = vmul.f32 %v611, %v611
    %v1195 = vmul.f32 %v616, %v616
    %v1196 = vmul.f32 %v619, %v619
    %v1197 = vmul.f32 %v624, %v624
    %v1198 = vmul.f32 %v627, %v627
    %v1199 = vmul.f32 %v632, %v632
    %v1200 = vmul.f32 %v635, %v635
    %v1201 = vmul.f32 %v640, %v640
    %v1202 = vmul.f32 %v643, %v643
    %v1203 = vmul.f32 %v648, %v648
    %v1204 = vmul.f32 %v651, %v651
    %v1205 = vmul.f32 %v656, %v656
    %v1206 = vmul.f32 %v659, %v659
    %v1207 = vmul.f32 %v664, %v664
    %v1208 = vmul.f32 %v667, %v667
    %v1209 = vmul.f32 %v672, %v672
    %v1210 = vmul.f32 %v675, %v675
    %v1211 = vmul.f32 %v680, %v680
    %v1212 = vmul.f32 %v683, %v683
    %v1213 = vmul.f32 %v688, %v688
    %v1214 = vmul.f32 %v691, %v691
    %v1215 = vsel %vm1015, %v1151, 0.0
    %v1216 = vsel %vm1015, %v1152, 0.0
    %v1217 = vadd.f32 %v1215, %v1216
    %v1218 = vsel %vm1015, %v1153, 0.0
    %v1219 = vadd.f32 %v1217, %v1218
    %v1220 = vsel %vm1015, %v1154, 0.0
    %v1221 = vadd.f32 %v1219, %v1220
    %v1222 = vsel %vm1015, %v1155, 0.0
    %v1223 = vadd.f32 %v1221, %v1222
    %v1224 = vsel %vm1015, %v1156, 0.0
    %v1225 = vadd.f32 %v1223, %v1224
    %v1226 = vsel %vm1015, %v1157, 0.0
    %v1227 = vadd.f32 %v1225, %v1226
    %v1228 = vsel %vm1015, %v1158, 0.0
    %v1229 = vadd.f32 %v1227, %v1228
    %v1230 = vsel %vm1015, %v1159, 0.0
    %v1231 = vadd.f32 %v1229, %v1230
    %v1232 = vsel %vm1015, %v1160, 0.0
    %v1233 = vadd.f32 %v1231, %v1232
    %v1234 = vsel %vm1015, %v1161, 0.0
    %v1235 = vadd.f32 %v1233, %v1234
    %v1236 = vsel %vm1015, %v1162, 0.0
    %v1237 = vadd.f32 %v1235, %v1236
    %v1238 = vsel %vm1015, %v1163, 0.0
    %v1239 = vadd.f32 %v1237, %v1238
    %v1240 = vsel %vm1015, %v1164, 0.0
    %v1241 = vadd.f32 %v1239, %v1240
    %v1242 = vsel %vm1015, %v1165, 0.0
    %v1243 = vadd.f32 %v1241, %v1242
    %v1244 = vsel %vm1015, %v1166, 0.0
    %v1245 = vadd.f32 %v1243, %v1244
    %v1246 = vsel %vm1015, %v1167, 0.0
    %v1247 = vadd.f32 %v1245, %v1246
    %v1248 = vsel %vm1015, %v1168, 0.0
    %v1249 = vadd.f32 %v1247, %v1248
    %v1250 = vsel %vm1015, %v1169, 0.0
    %v1251 = vadd.f32 %v1249, %v1250
    %v1252 = vsel %vm1015, %v1170, 0.0
    %v1253 = vadd.f32 %v1251, %v1252
    %v1254 = vsel %vm1015, %v1171, 0.0
    %v1255 = vadd.f32 %v1253, %v1254
    %v1256 = vsel %vm1015, %v1172, 0.0
    %v1257 = vadd.f32 %v1255, %v1256
    %v1258 = vsel %vm1015, %v1173, 0.0
    %v1259 = vadd.f32 %v1257, %v1258
    %v1260 = vsel %vm1015, %v1174, 0.0
    %v1261 = vadd.f32 %v1259, %v1260
    %v1262 = vsel %vm1015, %v1175, 0.0
    %v1263 = vadd.f32 %v1261, %v1262
    %v1264 = vsel %vm1015, %v1176, 0.0
    %v1265 = vadd.f32 %v1263, %v1264
    %v1266 = vsel %vm1015, %v1177, 0.0
    %v1267 = vadd.f32 %v1265, %v1266
    %v1268 = vsel %vm1015, %v1178, 0.0
    %v1269 = vadd.f32 %v1267, %v1268
    %v1270 = vsel %vm1015, %v1179, 0.0
    %v1271 = vadd.f32 %v1269, %v1270
    %v1272 = vsel %vm1015, %v1180, 0.0
    %v1273 = vadd.f32 %v1271, %v1272
    %v1274 = vsel %vm1015, %v1181, 0.0
    %v1275 = vadd.f32 %v1273, %v1274
    %v1276 = vsel %vm1015, %v1182, 0.0
    %v1277 = vadd.f32 %v1275, %v1276
    %v1278 = vsel %vm1015, %v1183, 0.0
    %v1279 = vadd.f32 %v1277, %v1278
    %v1280 = vsel %vm1015, %v1184, 0.0
    %v1281 = vadd.f32 %v1279, %v1280
    %v1282 = vsel %vm1015, %v1185, 0.0
    %v1283 = vadd.f32 %v1281, %v1282
    %v1284 = vsel %vm1015, %v1186, 0.0
    %v1285 = vadd.f32 %v1283, %v1284
    %v1286 = vsel %vm1015, %v1187, 0.0
    %v1287 = vadd.f32 %v1285, %v1286
    %v1288 = vsel %vm1015, %v1188, 0.0
    %v1289 = vadd.f32 %v1287, %v1288
    %v1290 = vsel %vm1015, %v1189, 0.0
    %v1291 = vadd.f32 %v1289, %v1290
    %v1292 = vsel %vm1015, %v1190, 0.0
    %v1293 = vadd.f32 %v1291, %v1292
    %v1294 = vsel %vm1015, %v1191, 0.0
    %v1295 = vadd.f32 %v1293, %v1294
    %v1296 = vsel %vm1015, %v1192, 0.0
    %v1297 = vadd.f32 %v1295, %v1296
    %v1298 = vsel %vm1015, %v1193, 0.0
    %v1299 = vadd.f32 %v1297, %v1298
    %v1300 = vsel %vm1015, %v1194, 0.0
    %v1301 = vadd.f32 %v1299, %v1300
    %v1302 = vsel %vm1015, %v1195, 0.0
    %v1303 = vadd.f32 %v1301, %v1302
    %v1304 = vsel %vm1015, %v1196, 0.0
    %v1305 = vadd.f32 %v1303, %v1304
    %v1306 = vsel %vm1015, %v1197, 0.0
    %v1307 = vadd.f32 %v1305, %v1306
    %v1308 = vsel %vm1015, %v1198, 0.0
    %v1309 = vadd.f32 %v1307, %v1308
    %v1310 = vsel %vm1015, %v1199, 0.0
    %v1311 = vadd.f32 %v1309, %v1310
    %v1312 = vsel %vm1015, %v1200, 0.0
    %v1313 = vadd.f32 %v1311, %v1312
    %v1314 = vsel %vm1015, %v1201, 0.0
    %v1315 = vadd.f32 %v1313, %v1314
    %v1316 = vsel %vm1015, %v1202, 0.0
    %v1317 = vadd.f32 %v1315, %v1316
    %v1318 = vsel %vm1015, %v1203, 0.0
    %v1319 = vadd.f32 %v1317, %v1318
    %v1320 = vsel %vm1015, %v1204, 0.0
    %v1321 = vadd.f32 %v1319, %v1320
    %v1322 = vsel %vm1015, %v1205, 0.0
    %v1323 = vadd.f32 %v1321, %v1322
    %v1324 = vsel %vm1015, %v1206, 0.0
    %v1325 = vadd.f32 %v1323, %v1324
    %v1326 = vsel %vm1015, %v1207, 0.0
    %v1327 = vadd.f32 %v1325, %v1326
    %v1328 = vsel %vm1015, %v1208, 0.0
    %v1329 = vadd.f32 %v1327, %v1328
    %v1330 = vsel %vm1015, %v1209, 0.0
    %v1331 = vadd.f32 %v1329, %v1330
    %v1332 = vsel %vm1015, %v1210, 0.0
    %v1333 = vadd.f32 %v1331, %v1332
    %v1334 = vsel %vm1015, %v1211, 0.0
    %v1335 = vadd.f32 %v1333, %v1334
    %v1336 = vsel %vm1015, %v1212, 0.0
    %v1337 = vadd.f32 %v1335, %v1336
    %v1338 = vsel %vm1015, %v1213, 0.0
    %v1339 = vadd.f32 %v1337, %v1338
    %v1340 = vsel %vm1015, %v1214, 0.0
    %v1341 = vadd.f32 %v1339, %v1340
    %v1342 = vrot.slane %v1341, 4
    %v1343 = vadd.f32 %v1341, %v1342
    %v1344 = vrot.slane %v1343, 2
    %v1345 = vadd.f32 %v1343, %v1344
    %v1346 = vrot.slane %v1345, 1
    %v1347 = vadd.f32 %v1345, %v1346
    %1348 = vst.msk [vmem:[#allocation2 + $0x1] sm:$0x1] %vm1149, %v1347
    // Predicated region
    $region10: #{tpu_custom_call.1} parent=1 // pred_check
      _
    $region11: #{tpu_custom_call.1} parent=1 // pred_check_branch
      %1350 = sbr.rel (0) target = $region13
    $region12: #{tpu_custom_call.1} parent=1 // pred_region
      _
    $region13: #{tpu_custom_call.1} parent=1 // pred_fallthru
      _
    // Predicated region
    $region14: #{tpu_custom_call.1} parent=1 // pred_check
      _
    $region15: #{tpu_custom_call.1} parent=1 // pred_check_branch
      %1352 = sbr.rel (0) target = $region17
    $region16: #{tpu_custom_call.1} parent=1 // pred_region
      %s1354 = ssub.s32 32, 32
      %1355 = vsyncadd [#allocation3], %s1354
      %s1357 = sshll.u32 [#allocation2], 4
      %s1358 = int_to_ptr.vmem [resolvable:$true] %s1357
      %1360 = dma.vmem_to_hbm [thread:$0]  %s1358, 32, %s3, [#allocation3]
    $region17: #{tpu_custom_call.1} parent=1 // pred_fallthru
      _
    // Predicated region
    $region18: #{tpu_custom_call.1} parent=1 // pred_check
      _
    $region19: #{tpu_custom_call.1} parent=1 // pred_check_branch
      %1362 = sbr.rel (0) target = $region21
    $region20: #{tpu_custom_call.1} parent=1 // pred_region
      _
    $region21: #{tpu_custom_call.1} parent=1 // pred_fallthru
      _
    // Predicated region
    $region22: #{tpu_custom_call.1} parent=1 // pred_check
      _
    $region23: #{tpu_custom_call.1} parent=1 // pred_check_branch
      %1364 = sbr.rel (0) target = $region25
    $region24: #{tpu_custom_call.1} parent=1 // pred_region
      %1365 = dma.done [#allocation3], 32
    $region25: #{tpu_custom_call.1} parent=1 // pred_fallthru
      _
    %1366 = vsyncpa [#allocation3], 1

</llo_original>
